<compile_context>
chip_gen: v6e
topology: v6e:2x2x1
jax: 0.10.0
libtpu: 0.0.40
codegen_flags: <defaults>
</compile_context>

<pallas_src>
import functools

import jax
import jax.numpy as jnp
from jax.experimental import pallas as pl
from jax.experimental.pallas import tpu as pltpu

LANE = 128                         # lanes per vreg
ACC_SUB = 8                        # sublanes of the vector accumulator
CHUNK_ROWS = 1024                  # rows per in-kernel compute chunk
VMEM_INPUT_BUDGET = 22 * 1024 * 1024   # double-buffered input bytes target
VMEM_LIMIT_BYTES = 32 * 1024 * 1024    # explicit scoped-VMEM limit (portable)
BLOCK_ROWS_CAP = 16384             # hard cap on rows per DMA block


def _mae_kernel(*refs, ignore_index, has_weights, n_valid_rows, rem_cols,
                block_rows, chunk_rows, n_seq, num_full_blocks, needs_mask):
    has_cnt = ignore_index is not None
    if has_weights:
        pred_ref, target_ref, weights_ref = refs[:3]
        out_refs = refs[3:]
    else:
        pred_ref, target_ref = refs[:2]
        weights_ref = None
        out_refs = refs[2:]
    if has_cnt:
        sum_ref, cnt_ref = out_refs
    else:
        (sum_ref,) = out_refs
        cnt_ref = None

    p = pl.program_id(0)   # parallel axis (megacore)
    s = pl.program_id(1)   # sequential accumulation axis

    @pl.when(s == 0)
    def _():
        sum_ref[...] = jnp.zeros_like(sum_ref)
        if cnt_ref is not None:
            cnt_ref[...] = jnp.zeros_like(cnt_ref)

    blk = p * n_seq + s                 # global (unclamped) block index
    n_chunks = block_rows // chunk_rows  # static
    g = chunk_rows // ACC_SUB            # static

    def process_chunk(c, masked):
        r0 = c * chunk_rows              # static python int -> free slice
        t_raw = target_ref[pl.ds(r0, chunk_rows), :]
        x = pred_ref[pl.ds(r0, chunk_rows), :].astype(jnp.float32)
        loss = jnp.abs(x - t_raw.astype(jnp.float32))
        if has_weights:
            w = weights_ref[pl.ds(r0, chunk_rows), :].astype(jnp.float32)
            loss = loss * w

        keep = None
        if ignore_index is not None:
            keep = t_raw != jnp.asarray(ignore_index, dtype=t_raw.dtype)

        if masked:
            # Global row/col validity (avoids 32-bit flat-index overflow).
            row = jax.lax.broadcasted_iota(jnp.int32, (chunk_rows, LANE), 0)
            grow = blk * block_rows + (r0 + row)
            tail = grow < n_valid_rows
            if rem_cols:
                col = jax.lax.broadcasted_iota(jnp.int32, (chunk_rows, LANE), 1)
                tail = tail | ((grow == n_valid_rows) & (col < rem_cols))
            keep = tail if keep is None else (keep & tail)

        if keep is not None:
            loss = jnp.where(keep, loss, jnp.float32(0))
        sum_ref[...] += loss.reshape(g, ACC_SUB, LANE).sum(axis=0)
        if cnt_ref is not None:
            cnt_ref[...] += keep.astype(jnp.float32).reshape(
                g, ACC_SUB, LANE).sum(axis=0)

    def run(masked):
        for c in range(n_chunks):        # static unroll (short, LLO-friendly)
            process_chunk(c, masked)

    if not needs_mask:
        run(False)
    elif num_full_blocks == 0:
        run(True)
    else:
        @pl.when(blk < num_full_blocks)      # fully-valid blocks: no mask work
        def _():
            run(False)

        @pl.when(blk >= num_full_blocks)     # ragged / phantom blocks
        def _():
            run(True)


def mae_loss(pred, target, weights=None, ignore_index=255, *, block_rows=None):
    """Masked mean-absolute-error, matching MAELoss.forward."""
    pred = pred.reshape(-1)
    target = target.reshape(-1)
    has_weights = weights is not None
    if has_weights:
        weights = weights.reshape(-1)

    n = int(pred.shape[0])
    if n == 0:
        return jnp.asarray(jnp.nan, dtype=jnp.float32)

    inputs = [pred, target] + ([weights] if has_weights else [])

    # Only pad when n is not lane-aligned (pad < 128 elems); aligned inputs are
    # reshaped zero-copy (pure bitcast, no HBM traffic).
    n_lane = ((n + LANE - 1) // LANE) * LANE
    if n_lane != n:
        # TODO(synk): this (rare) pad still copies the flat array once; a fully
        # zero-copy ragged path would need a 1D / manual-DMA layout.
        inputs = [jnp.pad(a, (0, n_lane - n)) for a in inputs]
    rows_total = n_lane // LANE
    inputs = [a.reshape(rows_total, LANE) for a in inputs]

    # Native sublane tile of the narrowest input dtype: 8/16/32 rows.
    row_align = max(max(8 * (4 // a.dtype.itemsize) for a in inputs), ACC_SUB)

    if block_rows is None:
        bytes_per_row = sum(LANE * a.dtype.itemsize for a in inputs)
        max_rows = VMEM_INPUT_BUDGET // (2 * bytes_per_row)   # double-buffered
        block_rows = min(rows_total, max_rows, BLOCK_ROWS_CAP)
    block_rows = max(row_align, (block_rows // row_align) * row_align)
    chunk_rows = min(block_rows, CHUNK_ROWS)
    if block_rows > chunk_rows:
        block_rows = (block_rows // chunk_rows) * chunk_rows

    num_blocks = -(-rows_total // block_rows)
    n_par = 2 if num_blocks >= 2 else 1     # both v7x TCs even for odd counts
    n_seq = -(-num_blocks // n_par)

    block_elems = block_rows * LANE
    coverage = n_par * n_seq * block_elems
    needs_mask = coverage != n              # ragged edge / pad / phantom block
    num_full_blocks = n // block_elems
    n_valid_rows = n // LANE
    rem_cols = n % LANE

    if n_par * n_seq == num_blocks:
        def in_map(p, s):
            return (p * n_seq + s, 0)
    else:
        last_blk = num_blocks - 1           # clamp phantom block's DMA index

        def in_map(p, s):
            return (jnp.minimum(p * n_seq + s, last_blk), 0)

    in_specs = [pl.BlockSpec((block_rows, LANE), in_map) for _ in inputs]
    out_spec = pl.BlockSpec((None, ACC_SUB, LANE), lambda p, s: (p, 0, 0))
    acc_shape = jax.ShapeDtypeStruct((n_par, ACC_SUB, LANE), jnp.float32)

    has_cnt = ignore_index is not None
    out_shape = (acc_shape, acc_shape) if has_cnt else acc_shape
    out_specs = (out_spec, out_spec) if has_cnt else out_spec

    bytes_accessed = sum(int(a.size) * a.dtype.itemsize for a in inputs)
    bytes_accessed += (2 if has_cnt else 1) * n_par * ACC_SUB * LANE * 4
    cost = pl.CostEstimate(flops=6 * n, transcendentals=0,
                           bytes_accessed=bytes_accessed)

    kernel = functools.partial(
        _mae_kernel,
        ignore_index=ignore_index,
        has_weights=has_weights,
        n_valid_rows=n_valid_rows,
        rem_cols=rem_cols,
        block_rows=block_rows,
        chunk_rows=chunk_rows,
        n_seq=n_seq,
        num_full_blocks=num_full_blocks,
        needs_mask=needs_mask)

    out = pl.pallas_call(
        kernel,
        out_shape=out_shape,
        grid=(n_par, n_seq),
        in_specs=in_specs,
        out_specs=out_specs,
        compiler_params=pltpu.CompilerParams(
            dimension_semantics=("parallel", "arbitrary"),
            vmem_limit_bytes=VMEM_LIMIT_BYTES),
        cost_estimate=cost,
    )(*inputs)

    if has_cnt:
        sum_out, cnt_out = out
        total_cnt = jnp.sum(cnt_out)        # 0/0 -> NaN, like torch empty mean
    else:
        sum_out = out
        total_cnt = jnp.float32(n)          # count is static when no ignore
    return jnp.sum(sum_out) / total_cnt


def _mae_loss_ref(pred, target, weights=None, ignore_index=255):
    pred = pred.astype(jnp.float32).reshape(-1)
    target_raw = target.reshape(-1)
    target = target_raw.astype(jnp.float32)
    loss = jnp.abs(pred - target)
    if weights is not None:
        loss = loss * weights.astype(jnp.float32).reshape(-1)
    if ignore_index is None:
        return jnp.mean(loss)
    mask = target_raw != jnp.asarray(ignore_index, dtype=target_raw.dtype)
    return (jnp.sum(jnp.where(mask, loss, 0.0))
            / jnp.sum(mask.astype(jnp.float32)))


if __name__ == "__main__":
    key = jax.random.PRNGKey(0)
    k1, k2, k3, k4, k5, k6, k7 = jax.random.split(key, 7)

    # Case 1/2: small f32 tensors, with and without weights.
    B, C, H, W = 2, 4, 16, 16
    pred = jax.random.normal(k1, (B, C, H, W), dtype=jnp.float32)
    target = jax.random.uniform(k2, (B, C, H, W), dtype=jnp.float32)
    ignore_mask = jax.random.uniform(k3, (B, C, H, W)) < 0.25
    target = jnp.where(ignore_mask, jnp.float32(255.0), target)
    weights = jax.random.uniform(k4, (B, C, H, W), dtype=jnp.float32)

    out1 = jax.block_until_ready(mae_loss(pred, target, None, 255))
    ref1 = _mae_loss_ref(pred, target, None, 255)
    assert jnp.allclose(out1, ref1, rtol=1e-5, atol=1e-6), (out1, ref1)

    out2 = jax.block_until_ready(mae_loss(pred, target, weights, 255))
    ref2 = _mae_loss_ref(pred, target, weights, 255)
    assert jnp.allclose(out2, ref2, rtol=1e-5, atol=1e-6), (out2, ref2)

    # Case 3: bf16 inputs streamed at native width (16-row native tile).
    pred_bf = pred.astype(jnp.bfloat16)
    target_bf = target.astype(jnp.bfloat16)
    weights_bf = weights.astype(jnp.bfloat16)
    out3 = jax.block_until_ready(mae_loss(pred_bf, target_bf, weights_bf, 255))
    ref3 = _mae_loss_ref(pred_bf, target_bf, weights_bf, 255)
    assert jnp.allclose(out3, ref3, rtol=1e-4, atol=1e-5), (out3, ref3)

    # Case 4: exercises multi-chunk blocks, n_par=2 and the ragged last block
    # (2304 rows -> 2048-row blocks, 2 blocks, edge-masked second block).
    pred4 = jax.random.normal(k5, (2, 4, 192, 192), dtype=jnp.float32)
    target4 = jax.random.uniform(k6, (2, 4, 192, 192), dtype=jnp.float32)
    target4 = jnp.where(jax.random.uniform(k7, (2, 4, 192, 192)) < 0.25,
                        jnp.float32(255.0), target4)
    out4 = jax.block_until_ready(mae_loss(pred4, target4, None, 255))
    ref4 = _mae_loss_ref(pred4, target4, None, 255)
    assert jnp.allclose(out4, ref4, rtol=1e-5, atol=1e-6), (out4, ref4)

    # Case 5: non-lane-divisible size (1000 elems) -> pad + partial-row mask.
    pred5 = jax.random.normal(k1, (1000,), dtype=jnp.float32)
    target5 = jax.random.uniform(k2, (1000,), dtype=jnp.float32)
    target5 = jnp.where(jax.random.uniform(k3, (1000,)) < 0.25,
                        jnp.float32(255.0), target5)
    out5 = jax.block_until_ready(mae_loss(pred5, target5, None, 255))
    ref5 = _mae_loss_ref(pred5, target5, None, 255)
    assert jnp.allclose(out5, ref5, rtol=1e-5, atol=1e-6), (out5, ref5)

    # Case 6: odd block count (3 blocks via block_rows override) -> n_par=2
    # with a clamped phantom block that must contribute exactly zero.
    pred6 = jax.random.normal(k4, (3072,), dtype=jnp.float32)
    target6 = jax.random.uniform(k5, (3072,), dtype=jnp.float32)
    target6 = jnp.where(jax.random.uniform(k6, (3072,)) < 0.25,
                        jnp.float32(255.0), target6)
    weights6 = jax.random.uniform(k7, (3072,), dtype=jnp.float32)
    out6 = jax.block_until_ready(
        mae_loss(pred6, target6, weights6, 255, block_rows=8))
    ref6 = _mae_loss_ref(pred6, target6, weights6, 255)
    assert jnp.allclose(out6, ref6, rtol=1e-5, atol=1e-6), (out6, ref6)

    # Case 7: even block count, perfectly tiled, ignore_index=None (cnt output
    # dropped, static divide-by-n).
    pred7 = jax.random.normal(k2, (4096,), dtype=jnp.float32)
    target7 = jax.random.uniform(k3, (4096,), dtype=jnp.float32)
    out7 = jax.block_until_ready(
        mae_loss(pred7, target7, None, None, block_rows=8))
    ref7 = _mae_loss_ref(pred7, target7, None, None)
    assert jnp.allclose(out7, ref7, rtol=1e-5, atol=1e-6), (out7, ref7)

    print("KERNEL_OK")
</pallas_src>

<mosaic_0001>
module attributes {stable_mosaic.version = 11 : i64} {
  func.func @_mae_kernel(%arg0: i32, %arg1: i32, %arg2: memref<16x128xf32, #tpu.memory_space<vmem>>, %arg3: memref<16x128xf32, #tpu.memory_space<vmem>>, %arg4: memref<1x8x128xf32, #tpu.memory_space<vmem>>, %arg5: memref<1x8x128xf32, #tpu.memory_space<vmem>>) attributes {dimension_semantics = [#tpu.dimension_semantics<parallel>, #tpu.dimension_semantics<arbitrary>], iteration_bounds = array<i64: 1, 1>, scalar_prefetch = 0 : i64, scratch_operands = 0 : i64, tpu.core_type = #tpu.core_type<tc>, window_params = [{transform_indices = @transform_0, window_bounds = array<i64: 16, 128>}, {transform_indices = @transform_1, window_bounds = array<i64: 16, 128>}, {transform_indices = @transform_2, window_bounds = array<i64: 1, 8, 128>}, {transform_indices = @transform_3, window_bounds = array<i64: 1, 8, 128>}]} {
    %c0_i32 = arith.constant 0 : i32
    %0 = arith.cmpi eq, %arg1, %c0_i32 : i32
    %1 = arith.extui %0 : i1 to i32
    %c0_i32_0 = arith.constant 0 : i32
    %2 = arith.cmpi ne, %1, %c0_i32_0 : i32
    scf.if %2 {
      %cst_19 = arith.constant 0.000000e+00 : f32
      %29 = vector.broadcast %cst_19 : f32 to vector<8x128xf32>
      %c0_20 = arith.constant 0 : index
      %c0_21 = arith.constant 0 : index
      %c0_22 = arith.constant 0 : index
      %30 = vector.load %arg4[%c0_20, %c0_21, %c0_22] : memref<1x8x128xf32, #tpu.memory_space<vmem>>, vector<1x8x128xf32>
      %31 = vector.shape_cast %30 : vector<1x8x128xf32> to vector<8x128xf32>
      %32 = vector.shape_cast %29 : vector<8x128xf32> to vector<1x8x128xf32>
      tpu.vector_store %arg4[%c0_20, %c0_21, %c0_22], %32 {strides = array<i32>} : memref<1x8x128xf32, #tpu.memory_space<vmem>>, vector<1x8x128xf32>,
      %cst_23 = arith.constant 0.000000e+00 : f32
      %33 = vector.broadcast %cst_23 : f32 to vector<8x128xf32>
      %c0_24 = arith.constant 0 : index
      %c0_25 = arith.constant 0 : index
      %c0_26 = arith.constant 0 : index
      %34 = vector.load %arg5[%c0_24, %c0_25, %c0_26] : memref<1x8x128xf32, #tpu.memory_space<vmem>>, vector<1x8x128xf32>
      %35 = vector.shape_cast %34 : vector<1x8x128xf32> to vector<8x128xf32>
      %36 = vector.shape_cast %33 : vector<8x128xf32> to vector<1x8x128xf32>
      tpu.vector_store %arg5[%c0_24, %c0_25, %c0_26], %36 {strides = array<i32>} : memref<1x8x128xf32, #tpu.memory_space<vmem>>, vector<1x8x128xf32>,
    } else {
    }
    %c0 = arith.constant 0 : index
    %c0_1 = arith.constant 0 : index
    %3 = vector.load %arg3[%c0, %c0_1] : memref<16x128xf32, #tpu.memory_space<vmem>>, vector<16x128xf32>
    %c0_2 = arith.constant 0 : index
    %c0_3 = arith.constant 0 : index
    %4 = vector.load %arg2[%c0_2, %c0_3] : memref<16x128xf32, #tpu.memory_space<vmem>>, vector<16x128xf32>
    %5 = arith.subf %4, %3 : vector<16x128xf32>
    %6 = math.absf %5 : vector<16x128xf32>
    %cst = arith.constant 2.550000e+02 : f32
    %7 = vector.broadcast %cst : f32 to vector<16x128xf32>
    %8 = arith.cmpf one, %3, %7 : vector<16x128xf32>
    %cst_4 = arith.constant 0.000000e+00 : f32
    %9 = vector.broadcast %cst_4 : f32 to vector<16x128xf32>
    %10 = arith.select %8, %6, %9 : vector<16x128xi1>, vector<16x128xf32>
    %c0_5 = arith.constant 0 : index
    %c0_6 = arith.constant 0 : index
    %c0_7 = arith.constant 0 : index
    %11 = vector.load %arg4[%c0_5, %c0_6, %c0_7] : memref<1x8x128xf32, #tpu.memory_space<vmem>>, vector<1x8x128xf32>
    %12 = vector.shape_cast %11 : vector<1x8x128xf32> to vector<8x128xf32>
    %13 = vector.shape_cast %10 : vector<16x128xf32> to vector<2x8x128xf32>
    %cst_8 = arith.constant dense<0.000000e+00> : vector<8x128xf32>
    %14 = vector.multi_reduction <add>, %13, %cst_8 [0] : vector<2x8x128xf32> to vector<8x128xf32>
    %15 = arith.addf %12, %14 : vector<8x128xf32>
    %c0_9 = arith.constant 0 : index
    %c0_10 = arith.constant 0 : index
    %c0_11 = arith.constant 0 : index
    %16 = vector.load %arg4[%c0_9, %c0_10, %c0_11] : memref<1x8x128xf32, #tpu.memory_space<vmem>>, vector<1x8x128xf32>
    %17 = vector.shape_cast %16 : vector<1x8x128xf32> to vector<8x128xf32>
    %18 = vector.shape_cast %15 : vector<8x128xf32> to vector<1x8x128xf32>
    tpu.vector_store %arg4[%c0_9, %c0_10, %c0_11], %18 {strides = array<i32>} : memref<1x8x128xf32, #tpu.memory_space<vmem>>, vector<1x8x128xf32>,
    %c0_12 = arith.constant 0 : index
    %c0_13 = arith.constant 0 : index
    %c0_14 = arith.constant 0 : index
    %19 = vector.load %arg5[%c0_12, %c0_13, %c0_14] : memref<1x8x128xf32, #tpu.memory_space<vmem>>, vector<1x8x128xf32>
    %20 = vector.shape_cast %19 : vector<1x8x128xf32> to vector<8x128xf32>
    %21 = arith.extui %8 : vector<16x128xi1> to vector<16x128xi32>
    %22 = arith.sitofp %21 : vector<16x128xi32> to vector<16x128xf32>
    %23 = vector.shape_cast %22 : vector<16x128xf32> to vector<2x8x128xf32>
    %cst_15 = arith.constant dense<0.000000e+00> : vector<8x128xf32>
    %24 = vector.multi_reduction <add>, %23, %cst_15 [0] : vector<2x8x128xf32> to vector<8x128xf32>
    %25 = arith.addf %20, %24 : vector<8x128xf32>
    %c0_16 = arith.constant 0 : index
    %c0_17 = arith.constant 0 : index
    %c0_18 = arith.constant 0 : index
    %26 = vector.load %arg5[%c0_16, %c0_17, %c0_18] : memref<1x8x128xf32, #tpu.memory_space<vmem>>, vector<1x8x128xf32>
    %27 = vector.shape_cast %26 : vector<1x8x128xf32> to vector<8x128xf32>
    %28 = vector.shape_cast %25 : vector<8x128xf32> to vector<1x8x128xf32>
    tpu.vector_store %arg5[%c0_16, %c0_17, %c0_18], %28 {strides = array<i32>} : memref<1x8x128xf32, #tpu.memory_space<vmem>>, vector<1x8x128xf32>,
    return
  }
  func.func @transform_0(%arg0: i32, %arg1: i32) -> (i32, i32) {
    %c1_i32 = arith.constant 1 : i32
    %0 = arith.muli %arg0, %c1_i32 : i32
    %1 = arith.addi %0, %arg1 : i32
    %c0_i32 = arith.constant 0 : i32
    %c0_i32_0 = arith.constant 0 : i32
    return %1, %c0_i32 : i32, i32
  }
  func.func @transform_1(%arg0: i32, %arg1: i32) -> (i32, i32) {
    %c1_i32 = arith.constant 1 : i32
    %0 = arith.muli %arg0, %c1_i32 : i32
    %1 = arith.addi %0, %arg1 : i32
    %c0_i32 = arith.constant 0 : i32
    %c0_i32_0 = arith.constant 0 : i32
    return %1, %c0_i32 : i32, i32
  }
  func.func @transform_2(%arg0: i32, %arg1: i32) -> (i32, i32, i32) {
    %c0_i32 = arith.constant 0 : i32
    %c0_i32_0 = arith.constant 0 : i32
    %c0_i32_1 = arith.constant 0 : i32
    return %arg0, %c0_i32, %c0_i32_0 : i32, i32, i32
  }
  func.func @transform_3(%arg0: i32, %arg1: i32) -> (i32, i32, i32) {
    %c0_i32 = arith.constant 0 : i32
    %c0_i32_0 = arith.constant 0 : i32
    %c0_i32_1 = arith.constant 0 : i32
    return %arg0, %c0_i32, %c0_i32_0 : i32, i32, i32
  }
}

</mosaic_0001>

<llo_original>
// kernel: tpu_custom_call.1
$region0: #{tpu_custom_call.1}
  #allocation0 [shape = 'u32[]', space=smem, size = 0x4, offset = 0x4, fixed_abs, tag = 'smem constant byte address 0x4 - core index']
  #allocation1 [shape = 'u32[144,128]{1,0:T(1,128)}', space=vmem, size = 0x12000, scoped, tag = 'internal scratch']
  %s0 = inlined_call_operand.hbm [shape: f32[16,128], index: 0, kind: input, shape index: {}]
  %s1 = inlined_call_operand.hbm [shape: f32[16,128], index: 1, kind: input, shape index: {}]
  %s2 = inlined_call_operand.hbm [shape: f32[1,8,128], index: 2, kind: output, shape index: {0}]
  %s3 = inlined_call_operand.hbm [shape: f32[1,8,128], index: 3, kind: output, shape index: {1}]
  %4 = xla_tuple %s2, %s3
  %s5 = sld [smem:[#allocation0]]
  $region38: #{tpu_custom_call.1} parent=0
    _
  %s7 = ssub.s32 1, %s5
  %s8 = scalar_select 0, %s7, %s5
  $region1: #{tpu_custom_call.1} parent=0
    #allocation2 [shape = 'u8[8192]{0}', space=vmem, size = 0x2000, scoped, tag = 'input window, operand 0, single buffered']
    #allocation3 [shape = 's32[1]{0}', space=sflag, size = 0x4, scoped, tag = 'scoped memory for tpu_custom_call.1']
    #allocation4 [shape = 's32[1]{0}', space=sflag, size = 0x4, scoped, tag = 'scoped memory for tpu_custom_call.1']
    #allocation5 [shape = 'u8[8192]{0}', space=vmem, size = 0x2000, scoped, tag = 'input window, operand 1, single buffered']
    #allocation6 [shape = 's32[1]{0}', space=sflag, size = 0x4, scoped, tag = 'scoped memory for tpu_custom_call.1']
    #allocation7 [shape = 'u8[4096]{0}', space=vmem, size = 0x1000, scoped, tag = 'output window, operand 0, single buffered']
    #allocation8 [shape = 'u8[4096]{0}', space=vmem, size = 0x1000, scoped, tag = 'output window, operand 1, single buffered']
    #allocation9 [shape = 's32[1]{0}', space=sflag, size = 0x4, scoped, tag = 'scoped memory for tpu_custom_call.1']
    %9 = vsyncpa [#allocation3], 0
    %10 = vsyncpa [#allocation6], 0
    %11 = vsyncpa [#allocation4], 0
    %12 = vsyncpa [#allocation9], 0
    // Predicated region
    $region2: #{tpu_custom_call.1} parent=1 // pred_check
      _
    $region3: #{tpu_custom_call.1} parent=1 // pred_check_branch
      %14 = sbr.rel (0) target = $region5
    $region4: #{tpu_custom_call.1} parent=1 // pred_region
      %s15 = sadd.s32 0, 0
      %s16 = smul.u32 2, %s15
      %s18 = ssub.s32 256, 256
      %19 = vsyncadd [#allocation3], %s18
      %s20 = smul.addr %s16, 128
      %s21 = scalar_lea.hbm %s0, %s20
      %s22 = sshll.u32 [#allocation2], 4
      %s23 = int_to_ptr.vmem [resolvable:$true] %s22
      %28 = dma.hbm_to_vmem [thread:$0]  %s21, 256, %s23, [#allocation3], 128, 128, 8
    $region5: #{tpu_custom_call.1} parent=1 // pred_fallthru
      _
    // Predicated region
    $region6: #{tpu_custom_call.1} parent=1 // pred_check
      _
    $region7: #{tpu_custom_call.1} parent=1 // pred_check_branch
      %30 = sbr.rel (0) target = $region9
    $region8: #{tpu_custom_call.1} parent=1 // pred_region
      %s31 = sadd.s32 0, 0
      %s32 = smul.u32 2, %s31
      %s34 = ssub.s32 256, 256
      %35 = vsyncadd [#allocation6], %s34
      %s36 = smul.addr %s32, 128
      %s37 = scalar_lea.hbm %s1, %s36
      %s38 = sshll.u32 [#allocation5], 4
      %s39 = int_to_ptr.vmem [resolvable:$true] %s38
      %44 = dma.hbm_to_vmem [thread:$0]  %s37, 256, %s39, [#allocation6], 128, 128, 8
    $region9: #{tpu_custom_call.1} parent=1 // pred_fallthru
      _
    // Predicated region
    $region10: #{tpu_custom_call.1} parent=1 // pred_check
      _
    $region11: #{tpu_custom_call.1} parent=1 // pred_check_branch
      %46 = sbr.rel (0) target = $region13
    $region12: #{tpu_custom_call.1} parent=1 // pred_region
      %47 = dma.done [#allocation3], 256
    $region13: #{tpu_custom_call.1} parent=1 // pred_fallthru
      _
    // Predicated region
    $region14: #{tpu_custom_call.1} parent=1 // pred_check
      _
    $region15: #{tpu_custom_call.1} parent=1 // pred_check_branch
      %49 = sbr.rel (0) target = $region17
    $region16: #{tpu_custom_call.1} parent=1 // pred_region
      %50 = dma.done [#allocation6], 256
    $region17: #{tpu_custom_call.1} parent=1 // pred_fallthru
      _
    %s51 = sadd.s32 0, 0
    %s52 = smul.u32 2, %s51
    %s53 = sadd.s32 0, 0
    %s54 = smul.u32 2, %s53
    %p55 = scmp.eq.s32.totalorder 0, 0
    // Predicated region
    $region18: #{tpu_custom_call.1} parent=1 // pred_check
      %p56 = pneg %p55
    $region19: #{tpu_custom_call.1} parent=1 // pred_check_branch
      %58 = sbr.rel (%p56) target = $region21
    $region20: #{tpu_custom_call.1} parent=1 // pred_region
      %59 = vst [vmem:[#allocation7] sm:$0xff] 0.0
      %60 = vst [vmem:[#allocation8] sm:$0xff] 0.0
    $region21: #{tpu_custom_call.1} parent=1 // pred_fallthru
      _
    %v61 = vld [vmem:[#allocation5] sm:$0xff]
    %v62 = vld [vmem:[#allocation5 + $0x8] sm:$0xff]
    %v63 = vld [vmem:[#allocation2] sm:$0xff]
    %v64 = vld [vmem:[#allocation2 + $0x8] sm:$0xff]
    %v65 = vsub.f32 %v63, %v61
    %v66 = vsub.f32 %v64, %v62
    %v67 = vand.u32 2147483647, %v65
    %v68 = vand.u32 2147483647, %v66
    %vm69 = vcmp.ne.f32.partialorder %v61, 255.0
    %vm70 = vcmp.ne.f32.partialorder %v62, 255.0
    %v71 = vsel %vm69, %v67, 0.0
    %v72 = vsel %vm70, %v68, 0.0
    %v73 = vld [vmem:[#allocation7] sm:$0xff]
    %v74 = vadd.f32 %v71, %v72
    %v75 = vadd.f32 %v73, %v74
    %76 = vst [vmem:[#allocation7] sm:$0xff] %v75
    %v77 = vld [vmem:[#allocation8] sm:$0xff]
    %v78 = vsel %vm69, 1, 0
    %v79 = vsel %vm70, 1, 0
    %v80 = vcvt.s32.f32 %v78
    %v81 = vcvt.s32.f32 %v79
    %v82 = vadd.f32 %v80, %v81
    %v83 = vadd.f32 %v77, %v82
    %84 = vst [vmem:[#allocation8] sm:$0xff] %v83
    // Predicated region
    $region22: #{tpu_custom_call.1} parent=1 // pred_check
      _
    $region23: #{tpu_custom_call.1} parent=1 // pred_check_branch
      %86 = sbr.rel (0) target = $region25
    $region24: #{tpu_custom_call.1} parent=1 // pred_region
      %s88 = ssub.s32 128, 128
      %89 = vsyncadd [#allocation4], %s88
      %s91 = sshll.u32 [#allocation7], 4
      %s92 = int_to_ptr.vmem [resolvable:$true] %s91
      %94 = dma.vmem_to_hbm [thread:$0]  %s92, 128, %s2, [#allocation4]
    $region25: #{tpu_custom_call.1} parent=1 // pred_fallthru
      _
    // Predicated region
    $region26: #{tpu_custom_call.1} parent=1 // pred_check
      _
    $region27: #{tpu_custom_call.1} parent=1 // pred_check_branch
      %96 = sbr.rel (0) target = $region29
    $region28: #{tpu_custom_call.1} parent=1 // pred_region
      %s98 = ssub.s32 128, 128
      %99 = vsyncadd [#allocation9], %s98
      %s101 = sshll.u32 [#allocation8], 4
      %s102 = int_to_ptr.vmem [resolvable:$true] %s101
      %104 = dma.vmem_to_hbm [thread:$0]  %s102, 128, %s3, [#allocation9]
    $region29: #{tpu_custom_call.1} parent=1 // pred_fallthru
      _
    // Predicated region
    $region30: #{tpu_custom_call.1} parent=1 // pred_check
      _
    $region31: #{tpu_custom_call.1} parent=1 // pred_check_branch
      %106 = sbr.rel (0) target = $region33
    $region32: #{tpu_custom_call.1} parent=1 // pred_region
      %107 = dma.done [#allocation4], 128
    $region33: #{tpu_custom_call.1} parent=1 // pred_fallthru
      _
    // Predicated region
    $region34: #{tpu_custom_call.1} parent=1 // pred_check
      _
    $region35: #{tpu_custom_call.1} parent=1 // pred_check_branch
      %109 = sbr.rel (0) target = $region37
    $region36: #{tpu_custom_call.1} parent=1 // pred_region
      %110 = dma.done [#allocation9], 128
    $region37: #{tpu_custom_call.1} parent=1 // pred_fallthru
      _
    %111 = vsyncpa [#allocation3], 1
    %112 = vsyncpa [#allocation6], 1
    %113 = vsyncpa [#allocation4], 1
    %114 = vsyncpa [#allocation9], 1

</llo_original>
